<compile_context>
chip_gen: v7x
topology: tpu7x:2x2x1
jax: 0.10.0
libtpu: 0.0.40
codegen_flags: <defaults>
</compile_context>

<pallas_src>
import functools

import jax
import jax.numpy as jnp
import numpy as np
from jax.experimental import pallas as pl
from jax.experimental.pallas import tpu as pltpu

HIDDEN = 256
TB_MAX = 1024          # batch tile cap; ~6-8 MiB/step -> safe even on v5e's 16 MiB scoped VMEM


def _round_up(x, m):
    return ((x + m - 1) // m) * m


def _cdiv(a, b):
    return -(-a // b)


@functools.lru_cache(maxsize=None)
def _device_kind():
    try:
        return jax.devices()[0].device_kind.lower()
    except Exception:  # pragma: no cover - no device visible at trace time
        return ""


def _num_tensorcores():
    # v7x has 2 TensorCores per chip; give the batch grid >=2 steps so both run.
    return 2 if "v7" in _device_kind() else 1


def _bf16_act_supported():
    # v6e/v7x have bf16 VPU+EUP; v5e and older keep the tanh/bias path in f32.
    k = _device_kind()
    return ("v6" in k) or ("v7" in k)


# ---------------------------------------------------------------------------
# Fused kernel: both 3-layer MLP heads, head-fused fc1/fc3, lane-dense output.
# ---------------------------------------------------------------------------
def _act(z_f32, bf16_act):
    """tanh producing the bf16 operand for the next matmul."""
    if bf16_act:
        return jnp.tanh(z_f32.astype(jnp.bfloat16))        # bf16 VPU/EUP (v6e/v7x)
    return jnp.tanh(z_f32).astype(jnp.bfloat16)            # f32 path (v5e/older)


def _fused_heads_kernel(x_ref,
                        w1_ref, b1_ref,
                        pw2_ref, pb2_ref,
                        vw2_ref, vb2_ref,
                        w3_ref, b3_ref,
                        out_ref, *, bf16_act):
    x = x_ref[...]                                          # [TB, obs_dim] bf16

    # fc1, both heads fused along N: one MXU matmul -> [TB, 512]
    h1 = _act(jnp.dot(x, w1_ref[...], preferred_element_type=jnp.float32)
              + b1_ref[...], bf16_act)

    # fc2: two 256x256 matmuls on the lane halves (block-diag would double FLOPs)
    h2p = _act(jnp.dot(h1[:, :HIDDEN], pw2_ref[...],
                       preferred_element_type=jnp.float32) + pb2_ref[...], bf16_act)
    h2v = _act(jnp.dot(h1[:, HIDDEN:], vw2_ref[...],
                       preferred_element_type=jnp.float32) + vb2_ref[...], bf16_act)

    # fc3, both heads fused along K: one matmul into the lane-dense output slab
    # (logits in cols [0, num_outputs), value in col num_outputs, rest zero).
    h2 = jnp.concatenate([h2p, h2v], axis=-1)               # [TB, 512] bf16
    out_ref[...] = (jnp.dot(h2, w3_ref[...], preferred_element_type=jnp.float32)
                    + b3_ref[...])


# ---------------------------------------------------------------------------
# One-time weight packing (kept out of the per-call path).
# ---------------------------------------------------------------------------
def pack_params(params):
    obs_dim = params["p_w1"].shape[0]
    num_outputs = params["p_w3"].shape[1]
    out_pad = _round_up(num_outputs + 1, 128)               # lane-dense fused output

    # fc1 fused along N: [obs_dim, 512]
    w1 = jnp.concatenate([params["p_w1"], params["v_w1"]], axis=1).astype(jnp.bfloat16)
    b1 = jnp.concatenate([params["p_b1"], params["v_b1"]], axis=1)          # f32 [1, 512]

    pw2 = params["p_w2"].astype(jnp.bfloat16)
    vw2 = params["v_w2"].astype(jnp.bfloat16)
    pb2 = params["p_b2"]
    vb2 = params["v_b2"]

    # fc3 fused along K: policy W3 -> cols [0, num_outputs); value W3 -> col num_outputs
    w3p = jnp.pad(params["p_w3"], ((0, 0), (0, out_pad - num_outputs)))
    w3v = jnp.pad(params["v_w3"], ((0, 0), (num_outputs, out_pad - num_outputs - 1)))
    w3 = jnp.concatenate([w3p, w3v], axis=0).astype(jnp.bfloat16)           # [512, out_pad]
    b3 = (jnp.pad(params["p_b3"], ((0, 0), (0, out_pad - num_outputs)))
          + jnp.pad(params["v_b3"], ((0, 0), (num_outputs, out_pad - num_outputs - 1))))

    return {"w1": w1, "b1": b1, "p_w2": pw2, "p_b2": pb2,
            "v_w2": vw2, "v_b2": vb2, "w3": w3, "b3": b3}


# ---------------------------------------------------------------------------
# Forward: one pallas_call for both heads.
# ---------------------------------------------------------------------------
def _fused_forward(packed, obs_flat, *, num_outputs):
    obs = obs_flat.astype(jnp.float32)
    B, obs_dim = obs.shape
    out_pad = packed["w3"].shape[1]

    # Batch tile: multiple of 16 (bf16 sublane pack), divisor-aware so b_pad - B
    # stays small, and >=2 grid steps on multi-TensorCore chips (v7x).
    min_steps = _num_tensorcores() if B >= 2 * 16 else 1
    n_steps = max(_cdiv(B, TB_MAX), min_steps)
    tb = min(TB_MAX, _round_up(_cdiv(B, n_steps), 16))
    b_pad = _round_up(B, tb)
    grid = (b_pad // tb,)

    x = obs
    if b_pad != B:
        x = jnp.pad(x, ((0, b_pad - B), (0, 0)))
    x = x.astype(jnp.bfloat16)                               # [b_pad, obs_dim]

    def full(shape):  # whole array resident in VMEM, constant block index
        return pl.BlockSpec(shape, lambda i: (0, 0))

    in_specs = [
        pl.BlockSpec((tb, obs_dim), lambda i: (i, 0)),       # x (lane dim = full dim)
        full((obs_dim, 2 * HIDDEN)), full((1, 2 * HIDDEN)),  # fused fc1
        full((HIDDEN, HIDDEN)), full((1, HIDDEN)),           # policy fc2
        full((HIDDEN, HIDDEN)), full((1, HIDDEN)),           # value fc2
        full((2 * HIDDEN, out_pad)), full((1, out_pad)),     # fused fc3 + bias
    ]
    out_specs = pl.BlockSpec((tb, out_pad), lambda i: (i, 0))

    # Advisory cost estimate for XLA's scheduler.
    flops = 2 * b_pad * (obs_dim * 2 * HIDDEN
                         + 2 * HIDDEN * HIDDEN
                         + 2 * HIDDEN * out_pad)
    transcendentals = 4 * b_pad * HIDDEN
    bytes_accessed = (
        x.size * 2 + b_pad * out_pad * 4
        + 2 * (packed["w1"].size + packed["p_w2"].size
               + packed["v_w2"].size + packed["w3"].size)
        + 4 * (packed["b1"].size + packed["p_b2"].size
               + packed["v_b2"].size + packed["b3"].size)
    )

    out = pl.pallas_call(
        functools.partial(_fused_heads_kernel, bf16_act=_bf16_act_supported()),
        out_shape=jax.ShapeDtypeStruct((b_pad, out_pad), jnp.float32),
        grid_spec=pltpu.PrefetchScalarGridSpec(
            num_scalar_prefetch=0,
            grid=grid,
            in_specs=in_specs,
            out_specs=out_specs,
        ),
        compiler_params=pltpu.CompilerParams(
            dimension_semantics=("parallel",),   # batch axis -> both TCs on v7x
        ),
        cost_estimate=pl.CostEstimate(
            flops=flops,
            transcendentals=transcendentals,
            bytes_accessed=bytes_accessed,
        ),
    )(x, packed["w1"], packed["b1"],
      packed["p_w2"], packed["p_b2"],
      packed["v_w2"], packed["v_b2"],
      packed["w3"], packed["b3"])

    # Slice padded lanes/rows back off before anything downstream (softmax/loss).
    logits = out[:B, :num_outputs]
    value = out[:B, num_outputs]
    return logits, value


class CustomFCNetPallas:
    """forward() + value_function() of CustomFCNet, fused into one TPU kernel."""

    def __init__(self, params):
        self.num_outputs = int(params["p_w3"].shape[1])
        self.packed = pack_params(params)                    # packed ONCE, reused per step
        self._forward = jax.jit(
            functools.partial(_fused_forward, num_outputs=self.num_outputs))

    def __call__(self, obs_flat):
        """Returns (logits [B, num_outputs], value [B])."""
        return self._forward(self.packed, obs_flat)


# ---------------------------------------------------------------------------
# Parameter init (normc_initializer, zero biases) — matches SlimFC defaults.
# ---------------------------------------------------------------------------
def normc_init(key, in_size, out_size, std=1.0):
    w = jax.random.normal(key, (in_size, out_size), dtype=jnp.float32)
    w = w * std / jnp.sqrt(jnp.sum(jnp.square(w), axis=0, keepdims=True))
    return w


def init_params(key, obs_dim, num_outputs):
    keys = jax.random.split(key, 6)
    return {
        # policy head
        "p_w1": normc_init(keys[0], obs_dim, HIDDEN),
        "p_b1": jnp.zeros((1, HIDDEN), jnp.float32),
        "p_w2": normc_init(keys[1], HIDDEN, HIDDEN),
        "p_b2": jnp.zeros((1, HIDDEN), jnp.float32),
        "p_w3": normc_init(keys[2], HIDDEN, num_outputs),
        "p_b3": jnp.zeros((1, num_outputs), jnp.float32),
        # value head
        "v_w1": normc_init(keys[3], obs_dim, HIDDEN),
        "v_b1": jnp.zeros((1, HIDDEN), jnp.float32),
        "v_w2": normc_init(keys[4], HIDDEN, HIDDEN),
        "v_b2": jnp.zeros((1, HIDDEN), jnp.float32),
        "v_w3": normc_init(keys[5], HIDDEN, 1),
        "v_b3": jnp.zeros((1, 1), jnp.float32),
    }


# ---------------------------------------------------------------------------
# Plain-JAX reference with the same dtype policy (bf16 MXU operands, f32 acc).
# ---------------------------------------------------------------------------
def _reference(params, obs_flat):
    x = obs_flat.astype(jnp.float32).astype(jnp.bfloat16)

    def mlp(x, w1, b1, w2, b2, w3, b3):
        h1 = jnp.tanh(jnp.dot(x, w1.astype(jnp.bfloat16),
                              preferred_element_type=jnp.float32) + b1)
        h2 = jnp.tanh(jnp.dot(h1.astype(jnp.bfloat16), w2.astype(jnp.bfloat16),
                              preferred_element_type=jnp.float32) + b2)
        return jnp.dot(h2.astype(jnp.bfloat16), w3.astype(jnp.bfloat16),
                       preferred_element_type=jnp.float32) + b3

    logits = mlp(x, params["p_w1"], params["p_b1"], params["p_w2"],
                 params["p_b2"], params["p_w3"], params["p_b3"])
    value = mlp(x, params["v_w1"], params["v_b1"], params["v_w2"],
                params["v_b2"], params["v_w3"], params["v_b3"])
    return logits, value.squeeze(1)


if __name__ == "__main__":
    # Small synthetic shapes: obs_space flattened to 16 features, 8 actions.
    B, OBS_DIM, NUM_OUTPUTS = 2, 16, 8

    key = jax.random.PRNGKey(0)
    pkey, xkey = jax.random.split(key)
    params = init_params(pkey, OBS_DIM, NUM_OUTPUTS)
    obs_flat = jax.random.normal(xkey, (B, OBS_DIM), dtype=jnp.float32)

    net = CustomFCNetPallas(params)
    logits, value = net(obs_flat)
    logits = jax.block_until_ready(logits)
    value = jax.block_until_ready(value)

    ref_logits, ref_value = _reference(params, obs_flat)
    np.testing.assert_allclose(np.asarray(logits), np.asarray(ref_logits),
                               rtol=2e-2, atol=2e-2)
    np.testing.assert_allclose(np.asarray(value), np.asarray(ref_value),
                               rtol=2e-2, atol=2e-2)
    assert logits.shape == (B, NUM_OUTPUTS)
    assert value.shape == (B,)

    print("KERNEL_OK")
</pallas_src>

<mosaic_0001>
module attributes {stable_mosaic.version = 11 : i64} {
  func.func @_fused_heads_kernel(%arg0: i32, %arg1: memref<16x16xbf16, #tpu.memory_space<vmem>>, %arg2: memref<16x512xbf16, #tpu.memory_space<vmem>>, %arg3: memref<1x512xf32, #tpu.memory_space<vmem>>, %arg4: memref<256x256xbf16, #tpu.memory_space<vmem>>, %arg5: memref<1x256xf32, #tpu.memory_space<vmem>>, %arg6: memref<256x256xbf16, #tpu.memory_space<vmem>>, %arg7: memref<1x256xf32, #tpu.memory_space<vmem>>, %arg8: memref<512x128xbf16, #tpu.memory_space<vmem>>, %arg9: memref<1x128xf32, #tpu.memory_space<vmem>>, %arg10: memref<16x128xf32, #tpu.memory_space<vmem>>) attributes {dimension_semantics = [#tpu.dimension_semantics<parallel>], iteration_bounds = array<i64: 1>, scalar_prefetch = 0 : i64, scratch_operands = 0 : i64, tpu.core_type = #tpu.core_type<tc>, window_params = [{transform_indices = @transform_0, window_bounds = array<i64: 16, 16>}, {pipeline_mode = #tpu.pipeline_mode<synchronous>, transform_indices = @transform_1, window_bounds = array<i64: 16, 512>}, {pipeline_mode = #tpu.pipeline_mode<synchronous>, transform_indices = @transform_2, window_bounds = array<i64: 1, 512>}, {pipeline_mode = #tpu.pipeline_mode<synchronous>, transform_indices = @transform_3, window_bounds = array<i64: 256, 256>}, {pipeline_mode = #tpu.pipeline_mode<synchronous>, transform_indices = @transform_4, window_bounds = array<i64: 1, 256>}, {pipeline_mode = #tpu.pipeline_mode<synchronous>, transform_indices = @transform_5, window_bounds = array<i64: 256, 256>}, {pipeline_mode = #tpu.pipeline_mode<synchronous>, transform_indices = @transform_6, window_bounds = array<i64: 1, 256>}, {pipeline_mode = #tpu.pipeline_mode<synchronous>, transform_indices = @transform_7, window_bounds = array<i64: 512, 128>}, {pipeline_mode = #tpu.pipeline_mode<synchronous>, transform_indices = @transform_8, window_bounds = array<i64: 1, 128>}, {transform_indices = @transform_9, window_bounds = array<i64: 16, 128>}]} {
    %c0 = arith.constant 0 : index
    %c0_0 = arith.constant 0 : index
    %0 = vector.load %arg1[%c0, %c0_0] : memref<16x16xbf16, #tpu.memory_space<vmem>>, vector<16x16xbf16>
    %c0_1 = arith.constant 0 : index
    %c0_2 = arith.constant 0 : index
    %1 = vector.load %arg2[%c0_1, %c0_2] : memref<16x512xbf16, #tpu.memory_space<vmem>>, vector<16x512xbf16>
    %cst = arith.constant dense<0.000000e+00> : vector<16x512xf32>
    %2 = tpu.matmul %0, %1, %cst {dimension_numbers = #tpu.dot_dimension_numbers<[1], [0], [0], [1], [0, 0, 1, 1], [], []>} : vector<16x16xbf16>, vector<16x512xbf16>, vector<16x512xf32> -> vector<16x512xf32>
    %c0_3 = arith.constant 0 : index
    %c0_4 = arith.constant 0 : index
    %3 = vector.load %arg3[%c0_3, %c0_4] : memref<1x512xf32, #tpu.memory_space<vmem>>, vector<1x512xf32>
    %4 = vector.broadcast %3 : vector<1x512xf32> to vector<16x512xf32>
    %5 = arith.addf %2, %4 : vector<16x512xf32>
    %6 = math.tanh %5 : vector<16x512xf32>
    %7 = arith.truncf %6 : vector<16x512xf32> to vector<16x512xbf16>
    %8 = vector.extract_strided_slice %7 {offsets = [0, 0], sizes = [16, 256], strides = [1, 1]} : vector<16x512xbf16> to vector<16x256xbf16>
    %c0_5 = arith.constant 0 : index
    %c0_6 = arith.constant 0 : index
    %9 = vector.load %arg4[%c0_5, %c0_6] : memref<256x256xbf16, #tpu.memory_space<vmem>>, vector<256x256xbf16>
    %cst_7 = arith.constant dense<0.000000e+00> : vector<16x256xf32>
    %10 = tpu.matmul %8, %9, %cst_7 {dimension_numbers = #tpu.dot_dimension_numbers<[1], [0], [0], [1], [0, 0, 1, 1], [], []>} : vector<16x256xbf16>, vector<256x256xbf16>, vector<16x256xf32> -> vector<16x256xf32>
    %c0_8 = arith.constant 0 : index
    %c0_9 = arith.constant 0 : index
    %11 = vector.load %arg5[%c0_8, %c0_9] : memref<1x256xf32, #tpu.memory_space<vmem>>, vector<1x256xf32>
    %12 = vector.broadcast %11 : vector<1x256xf32> to vector<16x256xf32>
    %13 = arith.addf %10, %12 : vector<16x256xf32>
    %14 = math.tanh %13 : vector<16x256xf32>
    %15 = arith.truncf %14 : vector<16x256xf32> to vector<16x256xbf16>
    %16 = vector.extract_strided_slice %7 {offsets = [0, 256], sizes = [16, 256], strides = [1, 1]} : vector<16x512xbf16> to vector<16x256xbf16>
    %c0_10 = arith.constant 0 : index
    %c0_11 = arith.constant 0 : index
    %17 = vector.load %arg6[%c0_10, %c0_11] : memref<256x256xbf16, #tpu.memory_space<vmem>>, vector<256x256xbf16>
    %cst_12 = arith.constant dense<0.000000e+00> : vector<16x256xf32>
    %18 = tpu.matmul %16, %17, %cst_12 {dimension_numbers = #tpu.dot_dimension_numbers<[1], [0], [0], [1], [0, 0, 1, 1], [], []>} : vector<16x256xbf16>, vector<256x256xbf16>, vector<16x256xf32> -> vector<16x256xf32>
    %c0_13 = arith.constant 0 : index
    %c0_14 = arith.constant 0 : index
    %19 = vector.load %arg7[%c0_13, %c0_14] : memref<1x256xf32, #tpu.memory_space<vmem>>, vector<1x256xf32>
    %20 = vector.broadcast %19 : vector<1x256xf32> to vector<16x256xf32>
    %21 = arith.addf %18, %20 : vector<16x256xf32>
    %22 = math.tanh %21 : vector<16x256xf32>
    %23 = arith.truncf %22 : vector<16x256xf32> to vector<16x256xbf16>
    %24 = tpu.concatenate %15, %23 in 1 : vector<16x256xbf16>, vector<16x256xbf16> -> vector<16x512xbf16>
    %c0_15 = arith.constant 0 : index
    %c0_16 = arith.constant 0 : index
    %25 = vector.load %arg8[%c0_15, %c0_16] : memref<512x128xbf16, #tpu.memory_space<vmem>>, vector<512x128xbf16>
    %cst_17 = arith.constant dense<0.000000e+00> : vector<16x128xf32>
    %26 = tpu.matmul %24, %25, %cst_17 {dimension_numbers = #tpu.dot_dimension_numbers<[1], [0], [0], [1], [0, 0, 1, 1], [], []>} : vector<16x512xbf16>, vector<512x128xbf16>, vector<16x128xf32> -> vector<16x128xf32>
    %c0_18 = arith.constant 0 : index
    %c0_19 = arith.constant 0 : index
    %27 = vector.load %arg9[%c0_18, %c0_19] : memref<1x128xf32, #tpu.memory_space<vmem>>, vector<1x128xf32>
    %28 = vector.broadcast %27 : vector<1x128xf32> to vector<16x128xf32>
    %29 = arith.addf %26, %28 : vector<16x128xf32>
    %c0_20 = arith.constant 0 : index
    %c0_21 = arith.constant 0 : index
    %30 = vector.load %arg10[%c0_20, %c0_21] : memref<16x128xf32, #tpu.memory_space<vmem>>, vector<16x128xf32>
    tpu.vector_store %arg10[%c0_20, %c0_21], %29 {strides = array<i32>} : memref<16x128xf32, #tpu.memory_space<vmem>>, vector<16x128xf32>,
    return
  }
  func.func @transform_0(%arg0: i32) -> (i32, i32) {
    %c0_i32 = arith.constant 0 : i32
    %c0_i32_0 = arith.constant 0 : i32
    return %arg0, %c0_i32 : i32, i32
  }
  func.func @transform_1(%arg0: i32) -> (i32, i32) {
    %c0_i32 = arith.constant 0 : i32
    %c0_i32_0 = arith.constant 0 : i32
    %c0_i32_1 = arith.constant 0 : i32
    return %c0_i32, %c0_i32_0 : i32, i32
  }
  func.func @transform_2(%arg0: i32) -> (i32, i32) {
    %c0_i32 = arith.constant 0 : i32
    %c0_i32_0 = arith.constant 0 : i32
    %c0_i32_1 = arith.constant 0 : i32
    return %c0_i32, %c0_i32_0 : i32, i32
  }
  func.func @transform_3(%arg0: i32) -> (i32, i32) {
    %c0_i32 = arith.constant 0 : i32
    %c0_i32_0 = arith.constant 0 : i32
    %c0_i32_1 = arith.constant 0 : i32
    return %c0_i32, %c0_i32_0 : i32, i32
  }
  func.func @transform_4(%arg0: i32) -> (i32, i32) {
    %c0_i32 = arith.constant 0 : i32
    %c0_i32_0 = arith.constant 0 : i32
    %c0_i32_1 = arith.constant 0 : i32
    return %c0_i32, %c0_i32_0 : i32, i32
  }
  func.func @transform_5(%arg0: i32) -> (i32, i32) {
    %c0_i32 = arith.constant 0 : i32
    %c0_i32_0 = arith.constant 0 : i32
    %c0_i32_1 = arith.constant 0 : i32
    return %c0_i32, %c0_i32_0 : i32, i32
  }
  func.func @transform_6(%arg0: i32) -> (i32, i32) {
    %c0_i32 = arith.constant 0 : i32
    %c0_i32_0 = arith.constant 0 : i32
    %c0_i32_1 = arith.constant 0 : i32
    return %c0_i32, %c0_i32_0 : i32, i32
  }
  func.func @transform_7(%arg0: i32) -> (i32, i32) {
    %c0_i32 = arith.constant 0 : i32
    %c0_i32_0 = arith.constant 0 : i32
    %c0_i32_1 = arith.constant 0 : i32
    return %c0_i32, %c0_i32_0 : i32, i32
  }
  func.func @transform_8(%arg0: i32) -> (i32, i32) {
    %c0_i32 = arith.constant 0 : i32
    %c0_i32_0 = arith.constant 0 : i32
    %c0_i32_1 = arith.constant 0 : i32
    return %c0_i32, %c0_i32_0 : i32, i32
  }
  func.func @transform_9(%arg0: i32) -> (i32, i32) {
    %c0_i32 = arith.constant 0 : i32
    %c0_i32_0 = arith.constant 0 : i32
    return %arg0, %c0_i32 : i32, i32
  }
}

</mosaic_0001>

<llo_original>
// kernel: _fused_forward.1
$region0: #{_fused_forward.1}
  #allocation0 [shape = 'u32[]', space=smem, size = 0x4, offset = 0x4, fixed_abs, tag = 'smem constant byte address 0x4 - core index']
  #allocation1 [shape = 'u32[144,128]{1,0:T(1,128)}', space=vmem, size = 0x12000, scoped, tag = 'internal scratch']
  %s0 = inlined_call_operand.vmem [shape: bf16[16,16], index: 0, kind: input, shape index: {}]
  %s1 = inlined_call_operand.vmem [shape: bf16[16,512], index: 1, kind: input, shape index: {}]
  %s2 = inlined_call_operand.vmem [shape: f32[1,512], index: 2, kind: input, shape index: {}]
  %s3 = inlined_call_operand.hbm [shape: bf16[256,256], index: 3, kind: input, shape index: {}]
  %s4 = inlined_call_operand.hbm [shape: f32[1,256], index: 4, kind: input, shape index: {}]
  %s5 = inlined_call_operand.hbm [shape: bf16[256,256], index: 5, kind: input, shape index: {}]
  %s6 = inlined_call_operand.hbm [shape: f32[1,256], index: 6, kind: input, shape index: {}]
  %s7 = inlined_call_operand.hbm [shape: bf16[512,128], index: 7, kind: input, shape index: {}]
  %s8 = inlined_call_operand.hbm [shape: f32[1,128], index: 8, kind: input, shape index: {}]
  %s9 = inlined_call_operand.vmem [shape: f32[16,128], index: 9, kind: output, shape index: {}]
  %s10 = sld [smem:[#allocation0]]
  $region70: #{_fused_forward.1} parent=0
    _
  %s12 = ssub.s32 1, %s10
  %s13 = scalar_select 0, %s12, %s10
  $region1: #{_fused_forward.1} parent=0
    #allocation2 [shape = 'u8[131072]{0}', space=vmem, size = 0x20000, scoped, tag = 'input window, operand 3, single buffered']
    #allocation3 [shape = 's32[1]{0}', space=sflag, size = 0x4, scoped, tag = 'scoped memory for _fused_forward.1']
    #allocation4 [shape = 'u8[1024]{0}', space=vmem, size = 0x400, scoped, tag = 'input window, operand 4, single buffered']
    #allocation5 [shape = 's32[1]{0}', space=sflag, size = 0x4, scoped, tag = 'scoped memory for _fused_forward.1']
    #allocation6 [shape = 'u8[131072]{0}', space=vmem, size = 0x20000, scoped, tag = 'input window, operand 5, single buffered']
    #allocation7 [shape = 'u8[1024]{0}', space=vmem, size = 0x400, scoped, tag = 'input window, operand 6, single buffered']
    #allocation8 [shape = 's32[1]{0}', space=sflag, size = 0x4, scoped, tag = 'scoped memory for _fused_forward.1']
    #allocation9 [shape = 'u8[131072]{0}', space=vmem, size = 0x20000, scoped, tag = 'input window, operand 7, single buffered']
    #allocation10 [shape = 'u8[512]{0}', space=vmem, size = 0x400, scoped, tag = 'input window, operand 8, single buffered']
    #allocation11 [shape = 's32[1]{0}', space=sflag, size = 0x4, scoped, tag = 'scoped memory for _fused_forward.1']
    %14 = vsyncpa [#allocation3], 0
    %15 = vsyncpa [#allocation5], 0
    %16 = vsyncpa [#allocation8], 0
    %17 = vsyncpa [#allocation11], 0
    // Predicated region
    $region2: #{_fused_forward.1} parent=1 // pred_check
      _
    $region3: #{_fused_forward.1} parent=1 // pred_check_branch
      %19 = sbr.rel (0) target = $region5
    $region4: #{_fused_forward.1} parent=1 // pred_region
      _
    $region5: #{_fused_forward.1} parent=1 // pred_fallthru
      _
    // Predicated region
    $region6: #{_fused_forward.1} parent=1 // pred_check
      _
    $region7: #{_fused_forward.1} parent=1 // pred_check_branch
      %21 = sbr.rel (0) target = $region9
    $region8: #{_fused_forward.1} parent=1 // pred_region
      _
    $region9: #{_fused_forward.1} parent=1 // pred_fallthru
      _
    // Predicated region
    $region10: #{_fused_forward.1} parent=1 // pred_check
      _
    $region11: #{_fused_forward.1} parent=1 // pred_check_branch
      %23 = sbr.rel (0) target = $region13
    $region12: #{_fused_forward.1} parent=1 // pred_region
      _
    $region13: #{_fused_forward.1} parent=1 // pred_fallthru
      _
    // Predicated region
    $region14: #{_fused_forward.1} parent=1 // pred_check
      _
    $region15: #{_fused_forward.1} parent=1 // pred_check_branch
      %25 = sbr.rel (0) target = $region17
    $region16: #{_fused_forward.1} parent=1 // pred_region
      %s27 = ssub.s32 4096, 4096
      %28 = vsyncadd [#allocation3], %s27
      %s29 = sshll.u32 [#allocation2], 4
      %s30 = int_to_ptr.vmem [resolvable:$true] %s29
      %35 = dma.hbm_to_vmem [thread:$0]  %s3, 4096, %s30, [#allocation3], 128, 128, 8
    $region17: #{_fused_forward.1} parent=1 // pred_fallthru
      _
    // Predicated region
    $region18: #{_fused_forward.1} parent=1 // pred_check
      _
    $region19: #{_fused_forward.1} parent=1 // pred_check_branch
      %37 = sbr.rel (0) target = $region21
    $region20: #{_fused_forward.1} parent=1 // pred_region
      %s39 = ssub.s32 32, 32
      %40 = vsyncadd [#allocation5], %s39
      %s42 = sshll.u32 [#allocation4], 4
      %s43 = int_to_ptr.vmem [resolvable:$true] %s42
      %45 = dma.hbm_to_vmem [thread:$0]  %s4, 32, %s43, [#allocation5]
    $region21: #{_fused_forward.1} parent=1 // pred_fallthru
      _
    // Predicated region
    $region22: #{_fused_forward.1} parent=1 // pred_check
      _
    $region23: #{_fused_forward.1} parent=1 // pred_check_branch
      %47 = sbr.rel (0) target = $region25
    $region24: #{_fused_forward.1} parent=1 // pred_region
      %s49 = ssub.s32 4096, 4096
      %50 = vsyncadd [#allocation5], %s49
      %s51 = sshll.u32 [#allocation6], 4
      %s52 = int_to_ptr.vmem [resolvable:$true] %s51
      %57 = dma.hbm_to_vmem [thread:$0]  %s5, 4096, %s52, [#allocation5], 128, 128, 8
    $region25: #{_fused_forward.1} parent=1 // pred_fallthru
      _
    // Predicated region
    $region26: #{_fused_forward.1} parent=1 // pred_check
      _
    $region27: #{_fused_forward.1} parent=1 // pred_check_branch
      %59 = sbr.rel (0) target = $region29
    $region28: #{_fused_forward.1} parent=1 // pred_region
      %s61 = ssub.s32 32, 32
      %62 = vsyncadd [#allocation8], %s61
      %s64 = sshll.u32 [#allocation7], 4
      %s65 = int_to_ptr.vmem [resolvable:$true] %s64
      %67 = dma.hbm_to_vmem [thread:$0]  %s6, 32, %s65, [#allocation8]
    $region29: #{_fused_forward.1} parent=1 // pred_fallthru
      _
    // Predicated region
    $region30: #{_fused_forward.1} parent=1 // pred_check
      _
    $region31: #{_fused_forward.1} parent=1 // pred_check_branch
      %69 = sbr.rel (0) target = $region33
    $region32: #{_fused_forward.1} parent=1 // pred_region
      %s71 = ssub.s32 4096, 4096
      %72 = vsyncadd [#allocation8], %s71
      %s73 = sshll.u32 [#allocation9], 4
      %s74 = int_to_ptr.vmem [resolvable:$true] %s73
      %79 = dma.hbm_to_vmem [thread:$0]  %s7, 4096, %s74, [#allocation8], 64, 64, 4
    $region33: #{_fused_forward.1} parent=1 // pred_fallthru
      _
    // Predicated region
    $region34: #{_fused_forward.1} parent=1 // pred_check
      _
    $region35: #{_fused_forward.1} parent=1 // pred_check_branch
      %81 = sbr.rel (0) target = $region37
    $region36: #{_fused_forward.1} parent=1 // pred_region
      %s83 = ssub.s32 16, 16
      %84 = vsyncadd [#allocation11], %s83
      %s86 = sshll.u32 [#allocation10], 4
      %s87 = int_to_ptr.vmem [resolvable:$true] %s86
      %89 = dma.hbm_to_vmem [thread:$0]  %s8, 16, %s87, [#allocation11]
    $region37: #{_fused_forward.1} parent=1 // pred_fallthru
      _
    // Predicated region
    $region38: #{_fused_forward.1} parent=1 // pred_check
      _
    $region39: #{_fused_forward.1} parent=1 // pred_check_branch
      %91 = sbr.rel (0) target = $region41
    $region40: #{_fused_forward.1} parent=1 // pred_region
      %92 = dma.done [#allocation3], 4096
    $region41: #{_fused_forward.1} parent=1 // pred_fallthru
      _
    // Predicated region
    $region42: #{_fused_forward.1} parent=1 // pred_check
      _
    $region43: #{_fused_forward.1} parent=1 // pred_check_branch
      %94 = sbr.rel (0) target = $region45
    $region44: #{_fused_forward.1} parent=1 // pred_region
      %95 = dma.done [#allocation5], 32
    $region45: #{_fused_forward.1} parent=1 // pred_fallthru
      _
    // Predicated region
    $region46: #{_fused_forward.1} parent=1 // pred_check
      _
    $region47: #{_fused_forward.1} parent=1 // pred_check_branch
      %97 = sbr.rel (0) target = $region49
    $region48: #{_fused_forward.1} parent=1 // pred_region
      %98 = dma.done [#allocation5], 4096
    $region49: #{_fused_forward.1} parent=1 // pred_fallthru
      _
    // Predicated region
    $region50: #{_fused_forward.1} parent=1 // pred_check
      _
    $region51: #{_fused_forward.1} parent=1 // pred_check_branch
      %100 = sbr.rel (0) target = $region53
    $region52: #{_fused_forward.1} parent=1 // pred_region
      %101 = dma.done [#allocation8], 32
    $region53: #{_fused_forward.1} parent=1 // pred_fallthru
      _
    // Predicated region
    $region54: #{_fused_forward.1} parent=1 // pred_check
      _
    $region55: #{_fused_forward.1} parent=1 // pred_check_branch
      %103 = sbr.rel (0) target = $region57
    $region56: #{_fused_forward.1} parent=1 // pred_region
      %104 = dma.done [#allocation8], 4096
    $region57: #{_fused_forward.1} parent=1 // pred_fallthru
      _
    // Predicated region
    $region58: #{_fused_forward.1} parent=1 // pred_check
      _
    $region59: #{_fused_forward.1} parent=1 // pred_check_branch
      %106 = sbr.rel (0) target = $region61
    $region60: #{_fused_forward.1} parent=1 // pred_region
      %107 = dma.done [#allocation11], 16
    $region61: #{_fused_forward.1} parent=1 // pred_fallthru
      _
    %v109 = vld [vmem:[%s0] sm:$0xf]
    %v110 = vld [vmem:[%s0 + $0x4] sm:$0xf]
    %v111 = vld [vmem:[%s1] sm:$0xff]
    %v112 = vld [vmem:[%s1 + $0x8] sm:$0xff]
    %v113 = vld [vmem:[%s1 + $0x10] sm:$0xff]
    %v114 = vld [vmem:[%s1 + $0x18] sm:$0xff]
    %v115 = vld [vmem:[%s2] sm:$0xf]
    %v117 = vlaneseq
    %v118 = vshrl.u32 %v117, 7
    %v119 = vsub.s32 0, %v118
    %v120 = vrot.slane %v115, %v119
    %v121 = vlaneseq
    %v122 = vshrl.u32 %v121, 7
    %v123 = vsub.s32 1, %v122
    %v124 = vrot.slane %v115, %v123
    %v125 = vlaneseq
    %v126 = vshrl.u32 %v125, 7
    %v127 = vsub.s32 2, %v126
    %v128 = vrot.slane %v115, %v127
    %v129 = vlaneseq
    %v130 = vshrl.u32 %v129, 7
    %v131 = vsub.s32 3, %v130
    %v132 = vrot.slane %v115, %v131
    %v139 = vunpack.c.l.b16 %v109
    %v140 = vunpack.c.l.b16 %v110
    %v141 = vpack.c.b16 %v140, %v139
    %v146 = vunpack.c.l.b16 %v111
    %v147 = vunpack.c.h.b16 %v111
    %v148 = vunpack.c.l.b16 %v112
    %v149 = vunpack.c.h.b16 %v112
    %v150 = vunpack.c.l.b16 %v113
    %v151 = vunpack.c.h.b16 %v113
    %v152 = vunpack.c.l.b16 %v114
    %v153 = vunpack.c.h.b16 %v114
    %v154 = vpack.c.b16 %v150, %v146
    %v155 = vpack.c.b16 %v151, %v147
    %v156 = vpack.c.b16 %v152, %v148
    %v157 = vpack.c.b16 %v153, %v149
    %vm162 = vcmask 130048
    %v164 = vsel %vm162, %v141, 0
    %166 = vmatprep.subr.bf16.mxu0 %v155
    %167 = vmatpush1.bf16.msra.mxu0 %v154
    %168 = vmatprep.subr.bf16.mxu0 0
    %169 = vmatpush1.bf16.msra.mxu0 0
    %170 = vmatprep.subr.bf16.mxu0 0
    %171 = vmatpush1.bf16.msra.mxu0 0
    %172 = vmatprep.subr.bf16.mxu0 0
    %173 = vmatpush1.bf16.msra.mxu0 0
    %174 = vmatprep.subr.bf16.mxu0 0
    %175 = vmatpush1.bf16.msra.mxu0 0
    %176 = vmatprep.subr.bf16.mxu0 0
    %177 = vmatpush1.bf16.msra.mxu0 0
    %178 = vmatprep.subr.bf16.mxu0 0
    %179 = vmatpush1.bf16.msra.mxu0 0
    %180 = vmatprep.subr.bf16.mxu0 0
    %181 = vmatpush1.bf16.msra.mxu0 0
    %182 = vmatprep.subr.bf16.mxu0 0
    %183 = vmatpush1.bf16.msra.mxu0 0
    %184 = vmatprep.subr.bf16.mxu0 0
    %185 = vmatpush1.bf16.msra.mxu0 0
    %186 = vmatprep.subr.bf16.mxu0 0
    %187 = vmatpush1.bf16.msra.mxu0 0
    %188 = vmatprep.subr.bf16.mxu0 0
    %189 = vmatpush1.bf16.msra.mxu0 0
    %190 = vmatprep.subr.bf16.mxu0 0
    %191 = vmatpush1.bf16.msra.mxu0 0
    %192 = vmatprep.subr.bf16.mxu0 0
    %193 = vmatpush1.bf16.msra.mxu0 0
    %194 = vmatprep.subr.bf16.mxu0 0
    %195 = vmatpush1.bf16.msra.mxu0 0
    %196 = vmatprep.subr.bf16.mxu0 0
    %197 = vmatpush1.bf16.msra.mxu0 0
    %198 = vmatprep.mubr.bf16.mxu0 0
    %199 = vmatmul.mubr.bf16.gmra.mrb[0].mxu0 %v164
    %v200 = vpop.f32.mrb[0].mxu0
    %v201 = vadd.f32 %v120, %v200
    %v202 = vpop.f32.mrb[0].mxu0
    %v203 = vadd.f32 %v124, %v202
    %v204 = vpop.f32.mrb[0].mxu0
    %v205 = vadd.f32 %v120, %v204
    %v206 = vpop.f32.mrb[0].mxu0
    %v207 = vadd.f32 %v124, %v206
    %208 = vdwg.mxu0
    %209 = vmatprep.subr.bf16.mxu0 %v157
    %210 = vmatpush1.bf16.msra.mxu0 %v156
    %211 = vmatprep.subr.bf16.mxu0 0
    %212 = vmatpush1.bf16.msra.mxu0 0
    %213 = vmatprep.subr.bf16.mxu0 0
    %214 = vmatpush1.bf16.msra.mxu0 0
    %215 = vmatprep.subr.bf16.mxu0 0
    %216 = vmatpush1.bf16.msra.mxu0 0
    %217 = vmatprep.subr.bf16.mxu0 0
    %218 = vmatpush1.bf16.msra.mxu0 0
    %219 = vmatprep.subr.bf16.mxu0 0
    %220 = vmatpush1.bf16.msra.mxu0 0
    %221 = vmatprep.subr.bf16.mxu0 0
    %222 = vmatpush1.bf16.msra.mxu0 0
    %223 = vmatprep.subr.bf16.mxu0 0
    %224 = vmatpush1.bf16.msra.mxu0 0
    %225 = vmatprep.subr.bf16.mxu0 0
    %226 = vmatpush1.bf16.msra.mxu0 0
    %227 = vmatprep.subr.bf16.mxu0 0
    %228 = vmatpush1.bf16.msra.mxu0 0
    %229 = vmatprep.subr.bf16.mxu0 0
    %230 = vmatpush1.bf16.msra.mxu0 0
    %231 = vmatprep.subr.bf16.mxu0 0
    %232 = vmatpush1.bf16.msra.mxu0 0
    %233 = vmatprep.subr.bf16.mxu0 0
    %234 = vmatpush1.bf16.msra.mxu0 0
    %235 = vmatprep.subr.bf16.mxu0 0
    %236 = vmatpush1.bf16.msra.mxu0 0
    %237 = vmatprep.subr.bf16.mxu0 0
    %238 = vmatpush1.bf16.msra.mxu0 0
    %239 = vmatprep.subr.bf16.mxu0 0
    %240 = vmatpush1.bf16.msra.mxu0 0
    %241 = vmatprep.mubr.bf16.mxu0 0
    %242 = vmatmul.mubr.bf16.gmra.mrb[0].mxu0 %v164
    %v243 = vpop.f32.mrb[0].mxu0
    %v244 = vadd.f32 %v128, %v243
    %v245 = vpop.f32.mrb[0].mxu0
    %v246 = vadd.f32 %v132, %v245
    %v247 = vpop.f32.mrb[0].mxu0
    %v248 = vadd.f32 %v128, %v247
    %v249 = vpop.f32.mrb[0].mxu0
    %v250 = vadd.f32 %v132, %v249
    %251 = vdwg.mxu0
    %v252 = vtanh.pop %v201
    %v253 = vtanh.pop %v203
    %v254 = vtanh.pop %v244
    %v255 = vtanh.pop %v246
    %v256 = vtanh.pop %v205
    %v257 = vtanh.pop %v207
    %v258 = vtanh.pop %v248
    %v259 = vtanh.pop %v250
    %v260 = vpack.c.bf16 %v256, %v252
    %v261 = vpack.c.bf16 %v257, %v253
    %v262 = vpack.c.bf16 %v258, %v254
    %v263 = vpack.c.bf16 %v259, %v255
    %v264 = vld [vmem:[#allocation2] sm:$0xff]
    %v265 = vld [vmem:[#allocation2 + $0x8] sm:$0xff]
    %v266 = vld [vmem:[#allocation2 + $0x10] sm:$0xff]
    %v267 = vld [vmem:[#allocation2 + $0x18] sm:$0xff]
    %v268 = vld [vmem:[#allocation2 + $0x20] sm:$0xff]
    %v269 = vld [vmem:[#allocation2 + $0x28] sm:$0xff]
    %v270 = vld [vmem:[#allocation2 + $0x30] sm:$0xff]
    %v271 = vld [vmem:[#allocation2 + $0x38] sm:$0xff]
    %v272 = vld [vmem:[#allocation2 + $0x40] sm:$0xff]
    %v273 = vld [vmem:[#allocation2 + $0x48] sm:$0xff]
    %v274 = vld [vmem:[#allocation2 + $0x50] sm:$0xff]
    %v275 = vld [vmem:[#allocation2 + $0x58] sm:$0xff]
    %v276 = vld [vmem:[#allocation2 + $0x60] sm:$0xff]
    %v277 = vld [vmem:[#allocation2 + $0x68] sm:$0xff]
    %v278 = vld [vmem:[#allocation2 + $0x70] sm:$0xff]
    %v279 = vld [vmem:[#allocation2 + $0x78] sm:$0xff]
    %v280 = vld [vmem:[#allocation2 + $0x80] sm:$0xff]
    %v281 = vld [vmem:[#allocation2 + $0x88] sm:$0xff]
    %v282 = vld [vmem:[#allocation2 + $0x90] sm:$0xff]
    %v283 = vld [vmem:[#allocation2 + $0x98] sm:$0xff]
    %v284 = vld [vmem:[#allocation2 + $0xa0] sm:$0xff]
    %v285 = vld [vmem:[#allocation2 + $0xa8] sm:$0xff]
    %v286 = vld [vmem:[#allocation2 + $0xb0] sm:$0xff]
    %v287 = vld [vmem:[#allocation2 + $0xb8] sm:$0xff]
    %v288 = vld [vmem:[#allocation2 + $0xc0] sm:$0xff]
    %v289 = vld [vmem:[#allocation2 + $0xc8] sm:$0xff]
    %v290 = vld [vmem:[#allocation2 + $0xd0] sm:$0xff]
    %v291 = vld [vmem:[#allocation2 + $0xd8] sm:$0xff]
    %v292 = vld [vmem:[#allocation2 + $0xe0] sm:$0xff]
    %v293 = vld [vmem:[#allocation2 + $0xe8] sm:$0xff]
    %v294 = vld [vmem:[#allocation2 + $0xf0] sm:$0xff]
    %v295 = vld [vmem:[#allocation2 + $0xf8] sm:$0xff]
    %v296 = vld [vmem:[#allocation4] sm:$0x3]
    %v298 = vlaneseq
    %v299 = vshrl.u32 %v298, 7
    %v300 = vsub.s32 0, %v299
    %v301 = vrot.slane %v296, %v300
    %v302 = vlaneseq
    %v303 = vshrl.u32 %v302, 7
    %v304 = vsub.s32 1, %v303
    %v305 = vrot.slane %v296, %v304
    %v340 = vunpack.c.l.b16 %v264
    %v341 = vunpack.c.h.b16 %v264
    %v342 = vunpack.c.l.b16 %v265
    %v343 = vunpack.c.h.b16 %v265
    %v344 = vunpack.c.l.b16 %v266
    %v345 = vunpack.c.h.b16 %v266
    %v346 = vunpack.c.l.b16 %v267
    %v347 = vunpack.c.h.b16 %v267
    %v348 = vunpack.c.l.b16 %v268
    %v349 = vunpack.c.h.b16 %v268
    %v350 = vunpack.c.l.b16 %v269
    %v351 = vunpack.c.h.b16 %v269
    %v352 = vunpack.c.l.b16 %v270
    %v353 = vunpack.c.h.b16 %v270
    %v354 = vunpack.c.l.b16 %v271
    %v355 = vunpack.c.h.b16 %v271
    %v356 = vunpack.c.l.b16 %v272
    %v357 = vunpack.c.h.b16 %v272
    %v358 = vunpack.c.l.b16 %v273
    %v359 = vunpack.c.h.b16 %v273
    %v360 = vunpack.c.l.b16 %v274
    %v361 = vunpack.c.h.b16 %v274
    %v362 = vunpack.c.l.b16 %v275
    %v363 = vunpack.c.h.b16 %v275
    %v364 = vunpack.c.l.b16 %v276
    %v365 = vunpack.c.h.b16 %v276
    %v366 = vunpack.c.l.b16 %v277
    %v367 = vunpack.c.h.b16 %v277
    %v368 = vunpack.c.l.b16 %v278
    %v369 = vunpack.c.h.b16 %v278
    %v370 = vunpack.c.l.b16 %v279
    %v371 = vunpack.c.h.b16 %v279
    %v372 = vunpack.c.l.b16 %v280
    %v373 = vunpack.c.h.b16 %v280
    %v374 = vunpack.c.l.b16 %v281
    %v375 = vunpack.c.h.b16 %v281
    %v376 = vunpack.c.l.b16 %v282
    %v377 = vunpack.c.h.b16 %v282
    %v378 = vunpack.c.l.b16 %v283
    %v379 = vunpack.c.h.b16 %v283
    %v380 = vunpack.c.l.b16 %v284
    %v381 = vunpack.c.h.b16 %v284
    %v382 = vunpack.c.l.b16 %v285
    %v383 = vunpack.c.h.b16 %v285
    %v384 = vunpack.c.l.b16 %v286
    %v385 = vunpack.c.h.b16 %v286
    %v386 = vunpack.c.l.b16 %v287
    %v387 = vunpack.c.h.b16 %v287
    %v388 = vunpack.c.l.b16 %v288
    %v389 = vunpack.c.h.b16 %v288
    %v390 = vunpack.c.l.b16 %v289
    %v391 = vunpack.c.h.b16 %v289
    %v392 = vunpack.c.l.b16 %v290
    %v393 = vunpack.c.h.b16 %v290
    %v394 = vunpack.c.l.b16 %v291
    %v395 = vunpack.c.h.b16 %v291
    %v396 = vunpack.c.l.b16 %v292
    %v397 = vunpack.c.h.b16 %v292
    %v398 = vunpack.c.l.b16 %v293
    %v399 = vunpack.c.h.b16 %v293
    %v400 = vunpack.c.l.b16 %v294
    %v401 = vunpack.c.h.b16 %v294
    %v402 = vunpack.c.l.b16 %v295
    %v403 = vunpack.c.h.b16 %v295
    %v404 = vpack.c.b16 %v342, %v340
    %v405 = vpack.c.b16 %v343, %v341
    %v406 = vpack.c.b16 %v346, %v344
    %v407 = vpack.c.b16 %v347, %v345
    %v408 = vpack.c.b16 %v350, %v348
    %v409 = vpack.c.b16 %v351, %v349
    %v410 = vpack.c.b16 %v354, %v352
    %v411 = vpack.c.b16 %v355, %v353
    %v412 = vpack.c.b16 %v358, %v356
    %v413 = vpack.c.b16 %v359, %v357
    %v414 = vpack.c.b16 %v362, %v360
    %v415 = vpack.c.b16 %v363, %v361
    %v416 = vpack.c.b16 %v366, %v364
    %v417 = vpack.c.b16 %v367, %v365
    %v418 = vpack.c.b16 %v370, %v368
    %v419 = vpack.c.b16 %v371, %v369
    %v420 = vpack.c.b16 %v374, %v372
    %v421 = vpack.c.b16 %v375, %v373
    %v422 = vpack.c.b16 %v378, %v376
    %v423 = vpack.c.b16 %v379, %v377
    %v424 = vpack.c.b16 %v382, %v380
    %v425 = vpack.c.b16 %v383, %v381
    %v426 = vpack.c.b16 %v386, %v384
    %v427 = vpack.c.b16 %v387, %v385
    %v428 = vpack.c.b16 %v390, %v388
    %v429 = vpack.c.b16 %v391, %v389
    %v430 = vpack.c.b16 %v394, %v392
    %v431 = vpack.c.b16 %v395, %v393
    %v432 = vpack.c.b16 %v398, %v396
    %v433 = vpack.c.b16 %v399, %v397
    %v434 = vpack.c.b16 %v402, %v400
    %v435 = vpack.c.b16 %v403, %v401
    %468 = vmatprep.subr.bf16.mxu0 %v405
    %469 = vmatpush1.bf16.msra.mxu0 %v404
    %470 = vmatprep.subr.bf16.mxu0 %v407
    %471 = vmatpush1.bf16.msra.mxu0 %v406
    %472 = vmatprep.subr.bf16.mxu0 %v409
    %473 = vmatpush1.bf16.msra.mxu0 %v408
    %474 = vmatprep.subr.bf16.mxu0 %v411
    %475 = vmatpush1.bf16.msra.mxu0 %v410
    %476 = vmatprep.subr.bf16.mxu0 %v413
    %477 = vmatpush1.bf16.msra.mxu0 %v412
    %478 = vmatprep.subr.bf16.mxu0 %v415
    %479 = vmatpush1.bf16.msra.mxu0 %v414
    %480 = vmatprep.subr.bf16.mxu0 %v417
    %481 = vmatpush1.bf16.msra.mxu0 %v416
    %482 = vmatprep.subr.bf16.mxu0 %v419
    %483 = vmatpush1.bf16.msra.mxu0 %v418
    %484 = vmatprep.subr.bf16.mxu0 %v421
    %485 = vmatpush1.bf16.msra.mxu0 %v420
    %486 = vmatprep.subr.bf16.mxu0 %v423
    %487 = vmatpush1.bf16.msra.mxu0 %v422
    %488 = vmatprep.subr.bf16.mxu0 %v425
    %489 = vmatpush1.bf16.msra.mxu0 %v424
    %490 = vmatprep.subr.bf16.mxu0 %v427
    %491 = vmatpush1.bf16.msra.mxu0 %v426
    %492 = vmatprep.subr.bf16.mxu0 %v429
    %493 = vmatpush1.bf16.msra.mxu0 %v428
    %494 = vmatprep.subr.bf16.mxu0 %v431
    %495 = vmatpush1.bf16.msra.mxu0 %v430
    %496 = vmatprep.subr.bf16.mxu0 %v433
    %497 = vmatpush1.bf16.msra.mxu0 %v432
    %498 = vmatprep.subr.bf16.mxu0 %v435
    %499 = vmatpush1.bf16.msra.mxu0 %v434
    %500 = vmatprep.mubr.bf16.mxu0 %v261
    %501 = vmatmul.mubr.bf16.gmra.mrb[0].mxu0 %v260
    %v502 = vpop.f32.mrb[0].mxu0
    %v503 = vadd.f32 %v301, %v502
    %v504 = vpop.f32.mrb[0].mxu0
    %v505 = vadd.f32 %v305, %v504
    %v506 = vpop.f32.mrb[0].mxu0
    %v507 = vadd.f32 %v301, %v506
    %v508 = vpop.f32.mrb[0].mxu0
    %v509 = vadd.f32 %v305, %v508
    %510 = vdwg.mxu0
    %v511 = vtanh.pop %v503
    %v512 = vtanh.pop %v505
    %v513 = vtanh.pop %v507
    %v514 = vtanh.pop %v509
    %v515 = vpack.c.bf16 %v513, %v511
    %v516 = vpack.c.bf16 %v514, %v512
    %v517 = vld [vmem:[#allocation6] sm:$0xff]
    %v518 = vld [vmem:[#allocation6 + $0x8] sm:$0xff]
    %v519 = vld [vmem:[#allocation6 + $0x10] sm:$0xff]
    %v520 = vld [vmem:[#allocation6 + $0x18] sm:$0xff]
    %v521 = vld [vmem:[#allocation6 + $0x20] sm:$0xff]
    %v522 = vld [vmem:[#allocation6 + $0x28] sm:$0xff]
    %v523 = vld [vmem:[#allocation6 + $0x30] sm:$0xff]
    %v524 = vld [vmem:[#allocation6 + $0x38] sm:$0xff]
    %v525 = vld [vmem:[#allocation6 + $0x40] sm:$0xff]
    %v526 = vld [vmem:[#allocation6 + $0x48] sm:$0xff]
    %v527 = vld [vmem:[#allocation6 + $0x50] sm:$0xff]
    %v528 = vld [vmem:[#allocation6 + $0x58] sm:$0xff]
    %v529 = vld [vmem:[#allocation6 + $0x60] sm:$0xff]
    %v530 = vld [vmem:[#allocation6 + $0x68] sm:$0xff]
    %v531 = vld [vmem:[#allocation6 + $0x70] sm:$0xff]
    %v532 = vld [vmem:[#allocation6 + $0x78] sm:$0xff]
    %v533 = vld [vmem:[#allocation6 + $0x80] sm:$0xff]
    %v534 = vld [vmem:[#allocation6 + $0x88] sm:$0xff]
    %v535 = vld [vmem:[#allocation6 + $0x90] sm:$0xff]
    %v536 = vld [vmem:[#allocation6 + $0x98] sm:$0xff]
    %v537 = vld [vmem:[#allocation6 + $0xa0] sm:$0xff]
    %v538 = vld [vmem:[#allocation6 + $0xa8] sm:$0xff]
    %v539 = vld [vmem:[#allocation6 + $0xb0] sm:$0xff]
    %v540 = vld [vmem:[#allocation6 + $0xb8] sm:$0xff]
    %v541 = vld [vmem:[#allocation6 + $0xc0] sm:$0xff]
    %v542 = vld [vmem:[#allocation6 + $0xc8] sm:$0xff]
    %v543 = vld [vmem:[#allocation6 + $0xd0] sm:$0xff]
    %v544 = vld [vmem:[#allocation6 + $0xd8] sm:$0xff]
    %v545 = vld [vmem:[#allocation6 + $0xe0] sm:$0xff]
    %v546 = vld [vmem:[#allocation6 + $0xe8] sm:$0xff]
    %v547 = vld [vmem:[#allocation6 + $0xf0] sm:$0xff]
    %v548 = vld [vmem:[#allocation6 + $0xf8] sm:$0xff]
    %v549 = vld [vmem:[#allocation7] sm:$0x3]
    %v551 = vlaneseq
    %v552 = vshrl.u32 %v551, 7
    %v553 = vsub.s32 0, %v552
    %v554 = vrot.slane %v549, %v553
    %v555 = vlaneseq
    %v556 = vshrl.u32 %v555, 7
    %v557 = vsub.s32 1, %v556
    %v558 = vrot.slane %v549, %v557
    %v593 = vunpack.c.l.b16 %v517
    %v594 = vunpack.c.h.b16 %v517
    %v595 = vunpack.c.l.b16 %v518
    %v596 = vunpack.c.h.b16 %v518
    %v597 = vunpack.c.l.b16 %v519
    %v598 = vunpack.c.h.b16 %v519
    %v599 = vunpack.c.l.b16 %v520
    %v600 = vunpack.c.h.b16 %v520
    %v601 = vunpack.c.l.b16 %v521
    %v602 = vunpack.c.h.b16 %v521
    %v603 = vunpack.c.l.b16 %v522
    %v604 = vunpack.c.h.b16 %v522
    %v605 = vunpack.c.l.b16 %v523
    %v606 = vunpack.c.h.b16 %v523
    %v607 = vunpack.c.l.b16 %v524
    %v608 = vunpack.c.h.b16 %v524
    %v609 = vunpack.c.l.b16 %v525
    %v610 = vunpack.c.h.b16 %v525
    %v611 = vunpack.c.l.b16 %v526
    %v612 = vunpack.c.h.b16 %v526
    %v613 = vunpack.c.l.b16 %v527
    %v614 = vunpack.c.h.b16 %v527
    %v615 = vunpack.c.l.b16 %v528
    %v616 = vunpack.c.h.b16 %v528
    %v617 = vunpack.c.l.b16 %v529
    %v618 = vunpack.c.h.b16 %v529
    %v619 = vunpack.c.l.b16 %v530
    %v620 = vunpack.c.h.b16 %v530
    %v621 = vunpack.c.l.b16 %v531
    %v622 = vunpack.c.h.b16 %v531
    %v623 = vunpack.c.l.b16 %v532
    %v624 = vunpack.c.h.b16 %v532
    %v625 = vunpack.c.l.b16 %v533
    %v626 = vunpack.c.h.b16 %v533
    %v627 = vunpack.c.l.b16 %v534
    %v628 = vunpack.c.h.b16 %v534
    %v629 = vunpack.c.l.b16 %v535
    %v630 = vunpack.c.h.b16 %v535
    %v631 = vunpack.c.l.b16 %v536
    %v632 = vunpack.c.h.b16 %v536
    %v633 = vunpack.c.l.b16 %v537
    %v634 = vunpack.c.h.b16 %v537
    %v635 = vunpack.c.l.b16 %v538
    %v636 = vunpack.c.h.b16 %v538
    %v637 = vunpack.c.l.b16 %v539
    %v638 = vunpack.c.h.b16 %v539
    %v639 = vunpack.c.l.b16 %v540
    %v640 = vunpack.c.h.b16 %v540
    %v641 = vunpack.c.l.b16 %v541
    %v642 = vunpack.c.h.b16 %v541
    %v643 = vunpack.c.l.b16 %v542
    %v644 = vunpack.c.h.b16 %v542
    %v645 = vunpack.c.l.b16 %v543
    %v646 = vunpack.c.h.b16 %v543
    %v647 = vunpack.c.l.b16 %v544
    %v648 = vunpack.c.h.b16 %v544
    %v649 = vunpack.c.l.b16 %v545
    %v650 = vunpack.c.h.b16 %v545
    %v651 = vunpack.c.l.b16 %v546
    %v652 = vunpack.c.h.b16 %v546
    %v653 = vunpack.c.l.b16 %v547
    %v654 = vunpack.c.h.b16 %v547
    %v655 = vunpack.c.l.b16 %v548
    %v656 = vunpack.c.h.b16 %v548
    %v657 = vpack.c.b16 %v595, %v593
    %v658 = vpack.c.b16 %v596, %v594
    %v659 = vpack.c.b16 %v599, %v597
    %v660 = vpack.c.b16 %v600, %v598
    %v661 = vpack.c.b16 %v603, %v601
    %v662 = vpack.c.b16 %v604, %v602
    %v663 = vpack.c.b16 %v607, %v605
    %v664 = vpack.c.b16 %v608, %v606
    %v665 = vpack.c.b16 %v611, %v609
    %v666 = vpack.c.b16 %v612, %v610
    %v667 = vpack.c.b16 %v615, %v613
    %v668 = vpack.c.b16 %v616, %v614
    %v669 = vpack.c.b16 %v619, %v617
    %v670 = vpack.c.b16 %v620, %v618
    %v671 = vpack.c.b16 %v623, %v621
    %v672 = vpack.c.b16 %v624, %v622
    %v673 = vpack.c.b16 %v627, %v625
    %v674 = vpack.c.b16 %v628, %v626
    %v675 = vpack.c.b16 %v631, %v629
    %v676 = vpack.c.b16 %v632, %v630
    %v677 = vpack.c.b16 %v635, %v633
    %v678 = vpack.c.b16 %v636, %v634
    %v679 = vpack.c.b16 %v639, %v637
    %v680 = vpack.c.b16 %v640, %v638
    %v681 = vpack.c.b16 %v643, %v641
    %v682 = vpack.c.b16 %v644, %v642
    %v683 = vpack.c.b16 %v647, %v645
    %v684 = vpack.c.b16 %v648, %v646
    %v685 = vpack.c.b16 %v651, %v649
    %v686 = vpack.c.b16 %v652, %v650
    %v687 = vpack.c.b16 %v655, %v653
    %v688 = vpack.c.b16 %v656, %v654
    %721 = vmatprep.subr.bf16.mxu0 %v658
    %722 = vmatpush1.bf16.msra.mxu0 %v657
    %723 = vmatprep.subr.bf16.mxu0 %v660
    %724 = vmatpush1.bf16.msra.mxu0 %v659
    %725 = vmatprep.subr.bf16.mxu0 %v662
    %726 = vmatpush1.bf16.msra.mxu0 %v661
    %727 = vmatprep.subr.bf16.mxu0 %v664
    %728 = vmatpush1.bf16.msra.mxu0 %v663
    %729 = vmatprep.subr.bf16.mxu0 %v666
    %730 = vmatpush1.bf16.msra.mxu0 %v665
    %731 = vmatprep.subr.bf16.mxu0 %v668
    %732 = vmatpush1.bf16.msra.mxu0 %v667
    %733 = vmatprep.subr.bf16.mxu0 %v670
    %734 = vmatpush1.bf16.msra.mxu0 %v669
    %735 = vmatprep.subr.bf16.mxu0 %v672
    %736 = vmatpush1.bf16.msra.mxu0 %v671
    %737 = vmatprep.subr.bf16.mxu0 %v674
    %738 = vmatpush1.bf16.msra.mxu0 %v673
    %739 = vmatprep.subr.bf16.mxu0 %v676
    %740 = vmatpush1.bf16.msra.mxu0 %v675
    %741 = vmatprep.subr.bf16.mxu0 %v678
    %742 = vmatpush1.bf16.msra.mxu0 %v677
    %743 = vmatprep.subr.bf16.mxu0 %v680
    %744 = vmatpush1.bf16.msra.mxu0 %v679
    %745 = vmatprep.subr.bf16.mxu0 %v682
    %746 = vmatpush1.bf16.msra.mxu0 %v681
    %747 = vmatprep.subr.bf16.mxu0 %v684
    %748 = vmatpush1.bf16.msra.mxu0 %v683
    %749 = vmatprep.subr.bf16.mxu0 %v686
    %750 = vmatpush1.bf16.msra.mxu0 %v685
    %751 = vmatprep.subr.bf16.mxu0 %v688
    %752 = vmatpush1.bf16.msra.mxu0 %v687
    %753 = vmatprep.mubr.bf16.mxu0 %v263
    %754 = vmatmul.mubr.bf16.gmra.mrb[0].mxu0 %v262
    %v755 = vpop.f32.mrb[0].mxu0
    %v756 = vadd.f32 %v554, %v755
    %v757 = vpop.f32.mrb[0].mxu0
    %v758 = vadd.f32 %v558, %v757
    %v759 = vpop.f32.mrb[0].mxu0
    %v760 = vadd.f32 %v554, %v759
    %v761 = vpop.f32.mrb[0].mxu0
    %v762 = vadd.f32 %v558, %v761
    %763 = vdwg.mxu0
    %v764 = vtanh.pop %v756
    %v765 = vtanh.pop %v758
    %v766 = vtanh.pop %v760
    %v767 = vtanh.pop %v762
    %v768 = vpack.c.bf16 %v766, %v764
    %v769 = vpack.c.bf16 %v767, %v765
    %v770 = vld [vmem:[#allocation9] sm:$0xf]
    %v771 = vld [vmem:[#allocation9 + $0x4] sm:$0xf]
    %v772 = vld [vmem:[#allocation9 + $0x8] sm:$0xf]
    %v773 = vld [vmem:[#allocation9 + $0xc] sm:$0xf]
    %v774 = vld [vmem:[#allocation9 + $0x10] sm:$0xf]
    %v775 = vld [vmem:[#allocation9 + $0x14] sm:$0xf]
    %v776 = vld [vmem:[#allocation9 + $0x18] sm:$0xf]
    %v777 = vld [vmem:[#allocation9 + $0x1c] sm:$0xf]
    %v778 = vld [vmem:[#allocation9 + $0x20] sm:$0xf]
    %v779 = vld [vmem:[#allocation9 + $0x24] sm:$0xf]
    %v780 = vld [vmem:[#allocation9 + $0x28] sm:$0xf]
    %v781 = vld [vmem:[#allocation9 + $0x2c] sm:$0xf]
    %v782 = vld [vmem:[#allocation9 + $0x30] sm:$0xf]
    %v783 = vld [vmem:[#allocation9 + $0x34] sm:$0xf]
    %v784 = vld [vmem:[#allocation9 + $0x38] sm:$0xf]
    %v785 = vld [vmem:[#allocation9 + $0x3c] sm:$0xf]
    %v786 = vld [vmem:[#allocation9 + $0x40] sm:$0xf]
    %v787 = vld [vmem:[#allocation9 + $0x44] sm:$0xf]
    %v788 = vld [vmem:[#allocation9 + $0x48] sm:$0xf]
    %v789 = vld [vmem:[#allocation9 + $0x4c] sm:$0xf]
    %v790 = vld [vmem:[#allocation9 + $0x50] sm:$0xf]
    %v791 = vld [vmem:[#allocation9 + $0x54] sm:$0xf]
    %v792 = vld [vmem:[#allocation9 + $0x58] sm:$0xf]
    %v793 = vld [vmem:[#allocation9 + $0x5c] sm:$0xf]
    %v794 = vld [vmem:[#allocation9 + $0x60] sm:$0xf]
    %v795 = vld [vmem:[#allocation9 + $0x64] sm:$0xf]
    %v796 = vld [vmem:[#allocation9 + $0x68] sm:$0xf]
    %v797 = vld [vmem:[#allocation9 + $0x6c] sm:$0xf]
    %v798 = vld [vmem:[#allocation9 + $0x70] sm:$0xf]
    %v799 = vld [vmem:[#allocation9 + $0x74] sm:$0xf]
    %v800 = vld [vmem:[#allocation9 + $0x78] sm:$0xf]
    %v801 = vld [vmem:[#allocation9 + $0x7c] sm:$0xf]
    %v802 = vld [vmem:[#allocation9 + $0x80] sm:$0xf]
    %v803 = vld [vmem:[#allocation9 + $0x84] sm:$0xf]
    %v804 = vld [vmem:[#allocation9 + $0x88] sm:$0xf]
    %v805 = vld [vmem:[#allocation9 + $0x8c] sm:$0xf]
    %v806 = vld [vmem:[#allocation9 + $0x90] sm:$0xf]
    %v807 = vld [vmem:[#allocation9 + $0x94] sm:$0xf]
    %v808 = vld [vmem:[#allocation9 + $0x98] sm:$0xf]
    %v809 = vld [vmem:[#allocation9 + $0x9c] sm:$0xf]
    %v810 = vld [vmem:[#allocation9 + $0xa0] sm:$0xf]
    %v811 = vld [vmem:[#allocation9 + $0xa4] sm:$0xf]
    %v812 = vld [vmem:[#allocation9 + $0xa8] sm:$0xf]
    %v813 = vld [vmem:[#allocation9 + $0xac] sm:$0xf]
    %v814 = vld [vmem:[#allocation9 + $0xb0] sm:$0xf]
    %v815 = vld [vmem:[#allocation9 + $0xb4] sm:$0xf]
    %v816 = vld [vmem:[#allocation9 + $0xb8] sm:$0xf]
    %v817 = vld [vmem:[#allocation9 + $0xbc] sm:$0xf]
    %v818 = vld [vmem:[#allocation9 + $0xc0] sm:$0xf]
    %v819 = vld [vmem:[#allocation9 + $0xc4] sm:$0xf]
    %v820 = vld [vmem:[#allocation9 + $0xc8] sm:$0xf]
    %v821 = vld [vmem:[#allocation9 + $0xcc] sm:$0xf]
    %v822 = vld [vmem:[#allocation9 + $0xd0] sm:$0xf]
    %v823 = vld [vmem:[#allocation9 + $0xd4] sm:$0xf]
    %v824 = vld [vmem:[#allocation9 + $0xd8] sm:$0xf]
    %v825 = vld [vmem:[#allocation9 + $0xdc] sm:$0xf]
    %v826 = vld [vmem:[#allocation9 + $0xe0] sm:$0xf]
    %v827 = vld [vmem:[#allocation9 + $0xe4] sm:$0xf]
    %v828 = vld [vmem:[#allocation9 + $0xe8] sm:$0xf]
    %v829 = vld [vmem:[#allocation9 + $0xec] sm:$0xf]
    %v830 = vld [vmem:[#allocation9 + $0xf0] sm:$0xf]
    %v831 = vld [vmem:[#allocation9 + $0xf4] sm:$0xf]
    %v832 = vld [vmem:[#allocation9 + $0xf8] sm:$0xf]
    %v833 = vld [vmem:[#allocation9 + $0xfc] sm:$0xf]
    %v834 = vld [vmem:[#allocation10] sm:$0x1]
    %v836 = vlaneseq
    %v837 = vshrl.u32 %v836, 7
    %v838 = vsub.s32 0, %v837
    %v839 = vrot.slane %v834, %v838
    %v905 = vunpack.c.l.b16 %v770
    %v906 = vunpack.c.l.b16 %v771
    %v907 = vunpack.c.l.b16 %v772
    %v908 = vunpack.c.l.b16 %v773
    %v909 = vunpack.c.l.b16 %v774
    %v910 = vunpack.c.l.b16 %v775
    %v911 = vunpack.c.l.b16 %v776
    %v912 = vunpack.c.l.b16 %v777
    %v913 = vunpack.c.l.b16 %v778
    %v914 = vunpack.c.l.b16 %v779
    %v915 = vunpack.c.l.b16 %v780
    %v916 = vunpack.c.l.b16 %v781
    %v917 = vunpack.c.l.b16 %v782
    %v918 = vunpack.c.l.b16 %v783
    %v919 = vunpack.c.l.b16 %v784
    %v920 = vunpack.c.l.b16 %v785
    %v921 = vunpack.c.l.b16 %v786
    %v922 = vunpack.c.l.b16 %v787
    %v923 = vunpack.c.l.b16 %v788
    %v924 = vunpack.c.l.b16 %v789
    %v925 = vunpack.c.l.b16 %v790
    %v926 = vunpack.c.l.b16 %v791
    %v927 = vunpack.c.l.b16 %v792
    %v928 = vunpack.c.l.b16 %v793
    %v929 = vunpack.c.l.b16 %v794
    %v930 = vunpack.c.l.b16 %v795
    %v931 = vunpack.c.l.b16 %v796
    %v932 = vunpack.c.l.b16 %v797
    %v933 = vunpack.c.l.b16 %v798
    %v934 = vunpack.c.l.b16 %v799
    %v935 = vunpack.c.l.b16 %v800
    %v936 = vunpack.c.l.b16 %v801
    %v937 = vunpack.c.l.b16 %v802
    %v938 = vunpack.c.l.b16 %v803
    %v939 = vunpack.c.l.b16 %v804
    %v940 = vunpack.c.l.b16 %v805
    %v941 = vunpack.c.l.b16 %v806
    %v942 = vunpack.c.l.b16 %v807
    %v943 = vunpack.c.l.b16 %v808
    %v944 = vunpack.c.l.b16 %v809
    %v945 = vunpack.c.l.b16 %v810
    %v946 = vunpack.c.l.b16 %v811
    %v947 = vunpack.c.l.b16 %v812
    %v948 = vunpack.c.l.b16 %v813
    %v949 = vunpack.c.l.b16 %v814
    %v950 = vunpack.c.l.b16 %v815
    %v951 = vunpack.c.l.b16 %v816
    %v952 = vunpack.c.l.b16 %v817
    %v953 = vunpack.c.l.b16 %v818
    %v954 = vunpack.c.l.b16 %v819
    %v955 = vunpack.c.l.b16 %v820
    %v956 = vunpack.c.l.b16 %v821
    %v957 = vunpack.c.l.b16 %v822
    %v958 = vunpack.c.l.b16 %v823
    %v959 = vunpack.c.l.b16 %v824
    %v960 = vunpack.c.l.b16 %v825
    %v961 = vunpack.c.l.b16 %v826
    %v962 = vunpack.c.l.b16 %v827
    %v963 = vunpack.c.l.b16 %v828
    %v964 = vunpack.c.l.b16 %v829
    %v965 = vunpack.c.l.b16 %v830
    %v966 = vunpack.c.l.b16 %v831
    %v967 = vunpack.c.l.b16 %v832
    %v968 = vunpack.c.l.b16 %v833
    %v969 = vpack.c.b16 %v906, %v905
    %v970 = vpack.c.b16 %v908, %v907
    %v971 = vpack.c.b16 %v910, %v909
    %v972 = vpack.c.b16 %v912, %v911
    %v973 = vpack.c.b16 %v914, %v913
    %v974 = vpack.c.b16 %v916, %v915
    %v975 = vpack.c.b16 %v918, %v917
    %v976 = vpack.c.b16 %v920, %v919
    %v977 = vpack.c.b16 %v922, %v921
    %v978 = vpack.c.b16 %v924, %v923
    %v979 = vpack.c.b16 %v926, %v925
    %v980 = vpack.c.b16 %v928, %v927
    %v981 = vpack.c.b16 %v930, %v929
    %v982 = vpack.c.b16 %v932, %v931
    %v983 = vpack.c.b16 %v934, %v933
    %v984 = vpack.c.b16 %v936, %v935
    %v985 = vpack.c.b16 %v938, %v937
    %v986 = vpack.c.b16 %v940, %v939
    %v987 = vpack.c.b16 %v942, %v941
    %v988 = vpack.c.b16 %v944, %v943
    %v989 = vpack.c.b16 %v946, %v945
    %v990 = vpack.c.b16 %v948, %v947
    %v991 = vpack.c.b16 %v950, %v949
    %v992 = vpack.c.b16 %v952, %v951
    %v993 = vpack.c.b16 %v954, %v953
    %v994 = vpack.c.b16 %v956, %v955
    %v995 = vpack.c.b16 %v958, %v957
    %v996 = vpack.c.b16 %v960, %v959
    %v997 = vpack.c.b16 %v962, %v961
    %v998 = vpack.c.b16 %v964, %v963
    %v999 = vpack.c.b16 %v966, %v965
    %v1000 = vpack.c.b16 %v968, %v967
    %1033 = vmatprep.subr.bf16.mxu0 0
    %1034 = vmatpush1.bf16.msra.mxu0 %v969
    %1035 = vmatprep.subr.bf16.mxu0 0
    %1036 = vmatpush1.bf16.msra.mxu0 %v970
    %1037 = vmatprep.subr.bf16.mxu0 0
    %1038 = vmatpush1.bf16.msra.mxu0 %v971
    %1039 = vmatprep.subr.bf16.mxu0 0
    %1040 = vmatpush1.bf16.msra.mxu0 %v972
    %1041 = vmatprep.subr.bf16.mxu0 0
    %1042 = vmatpush1.bf16.msra.mxu0 %v973
    %1043 = vmatprep.subr.bf16.mxu0 0
    %1044 = vmatpush1.bf16.msra.mxu0 %v974
    %1045 = vmatprep.subr.bf16.mxu0 0
    %1046 = vmatpush1.bf16.msra.mxu0 %v975
    %1047 = vmatprep.subr.bf16.mxu0 0
    %1048 = vmatpush1.bf16.msra.mxu0 %v976
    %1049 = vmatprep.subr.bf16.mxu0 0
    %1050 = vmatpush1.bf16.msra.mxu0 %v977
    %1051 = vmatprep.subr.bf16.mxu0 0
    %1052 = vmatpush1.bf16.msra.mxu0 %v978
    %1053 = vmatprep.subr.bf16.mxu0 0
    %1054 = vmatpush1.bf16.msra.mxu0 %v979
    %1055 = vmatprep.subr.bf16.mxu0 0
    %1056 = vmatpush1.bf16.msra.mxu0 %v980
    %1057 = vmatprep.subr.bf16.mxu0 0
    %1058 = vmatpush1.bf16.msra.mxu0 %v981
    %1059 = vmatprep.subr.bf16.mxu0 0
    %1060 = vmatpush1.bf16.msra.mxu0 %v982
    %1061 = vmatprep.subr.bf16.mxu0 0
    %1062 = vmatpush1.bf16.msra.mxu0 %v983
    %1063 = vmatprep.subr.bf16.mxu0 0
    %1064 = vmatpush1.bf16.msra.mxu0 %v984
    %1065 = vmatprep.mubr.bf16.mxu0 %v516
    %1066 = vmatmul.mubr.bf16.gmra.mrb[0].mxu0 %v515
    %v1067 = vpop.f32.mrb[0].mxu0
    %v1068 = vadd.f32 %v839, %v1067
    %v1069 = vpop.f32.mrb[0].mxu0
    %v1070 = vpop.f32.mrb[0].mxu0
    %v1071 = vadd.f32 %v839, %v1070
    %v1072 = vpop.f32.mrb[0].mxu0
    %1073 = vdwg.mxu0
    %1074 = vmatprep.subr.bf16.mxu0 0
    %1075 = vmatpush1.bf16.msra.mxu0 %v985
    %1076 = vmatprep.subr.bf16.mxu0 0
    %1077 = vmatpush1.bf16.msra.mxu0 %v986
    %1078 = vmatprep.subr.bf16.mxu0 0
    %1079 = vmatpush1.bf16.msra.mxu0 %v987
    %1080 = vmatprep.subr.bf16.mxu0 0
    %1081 = vmatpush1.bf16.msra.mxu0 %v988
    %1082 = vmatprep.subr.bf16.mxu0 0
    %1083 = vmatpush1.bf16.msra.mxu0 %v989
    %1084 = vmatprep.subr.bf16.mxu0 0
    %1085 = vmatpush1.bf16.msra.mxu0 %v990
    %1086 = vmatprep.subr.bf16.mxu0 0
    %1087 = vmatpush1.bf16.msra.mxu0 %v991
    %1088 = vmatprep.subr.bf16.mxu0 0
    %1089 = vmatpush1.bf16.msra.mxu0 %v992
    %1090 = vmatprep.subr.bf16.mxu0 0
    %1091 = vmatpush1.bf16.msra.mxu0 %v993
    %1092 = vmatprep.subr.bf16.mxu0 0
    %1093 = vmatpush1.bf16.msra.mxu0 %v994
    %1094 = vmatprep.subr.bf16.mxu0 0
    %1095 = vmatpush1.bf16.msra.mxu0 %v995
    %1096 = vmatprep.subr.bf16.mxu0 0
    %1097 = vmatpush1.bf16.msra.mxu0 %v996
    %1098 = vmatprep.subr.bf16.mxu0 0
    %1099 = vmatpush1.bf16.msra.mxu0 %v997
    %1100 = vmatprep.subr.bf16.mxu0 0
    %1101 = vmatpush1.bf16.msra.mxu0 %v998
    %1102 = vmatprep.subr.bf16.mxu0 0
    %1103 = vmatpush1.bf16.msra.mxu0 %v999
    %1104 = vmatprep.subr.bf16.mxu0 0
    %1105 = vmatpush1.bf16.msra.mxu0 %v1000
    %1106 = vmatprep.mubr.bf16.mxu0 %v769
    %1107 = vmatmul.mubr.bf16.gmra.mrb[0].mxu0 %v768
    %v1108 = vpop.f32.mrb[0].mxu0
    %v1109 = vadd.f32 %v1068, %v1108
    %v1110 = vpop.f32.mrb[0].mxu0
    %v1111 = vpop.f32.mrb[0].mxu0
    %v1112 = vadd.f32 %v1071, %v1111
    %v1113 = vpop.f32.mrb[0].mxu0
    %1114 = vdwg.mxu0
    %1115 = vst [vmem:[%s9] sm:$0xff] %v1109
    %1116 = vst [vmem:[%s9 + $0x8] sm:$0xff] %v1112
    // Predicated region
    $region62: #{_fused_forward.1} parent=1 // pred_check
      _
    $region63: #{_fused_forward.1} parent=1 // pred_check_branch
      %1118 = sbr.rel (0) target = $region65
    $region64: #{_fused_forward.1} parent=1 // pred_region
      _
    $region65: #{_fused_forward.1} parent=1 // pred_fallthru
      _
    // Predicated region
    $region66: #{_fused_forward.1} parent=1 // pred_check
      _
    $region67: #{_fused_forward.1} parent=1 // pred_check_branch
      %1120 = sbr.rel (0) target = $region69
    $region68: #{_fused_forward.1} parent=1 // pred_region
      _
    $region69: #{_fused_forward.1} parent=1 // pred_fallthru
      _
    %1121 = vsyncpa [#allocation3], 1
    %1122 = vsyncpa [#allocation5], 1
    %1123 = vsyncpa [#allocation8], 1
    %1124 = vsyncpa [#allocation11], 1

</llo_original>
